<compile_context>
chip_gen: v7x
topology: tpu7x:2x2x1
jax: 0.10.0
libtpu: 0.0.40
codegen_flags: <defaults>
</compile_context>

<pallas_src>
import functools

import jax
import jax.numpy as jnp
from jax.experimental import pallas as pl
from jax.experimental.pallas import tpu as pltpu


_LANE = 128
_MAX_CHUNKS = 64  # cap on the unrolled per-step accumulate loop (thw <= 8192)


def _round_up(x, m):
    return (x + m - 1) // m * m


def _gap_classifier_kernel(x_ref, w_ref, b_ref, o_ref, acc_ref, *,
                           hw, thw, inv_hw, grid_k):
    # x_ref: (TB, C, THW)  w_ref: (C, N)  b_ref: (1, N)  o_ref: (TB, N)
    # acc_ref: (TB, C, 128) f32 lane-shaped partial-sum accumulator.
    k = pl.program_id(1)
    n_chunks = thw // _LANE
    last = grid_k - 1
    last_start = last * thw  # element offset of the last spatial block

    @pl.when(k == 0)
    def _():
        acc_ref[...] = jnp.zeros_like(acc_ref)

    def accumulate(mask_padding):
        # Pure VPU adds over static, lane-aligned slices; the dtype cast is
        # folded per-slice so no full-block f32 temporary is materialized.
        for j in range(n_chunks):
            start = j * _LANE
            if mask_padding and last_start + start >= hw:
                continue  # chunk is entirely padding (static skip)
            chunk = x_ref[:, :, start:start + _LANE].astype(jnp.float32)
            if mask_padding and last_start + start + _LANE > hw:
                lane = jax.lax.broadcasted_iota(jnp.int32, (1, 1, _LANE), 2)
                chunk = jnp.where(last_start + start + lane < hw, chunk, 0.0)
            acc_ref[...] += chunk

    padded = (hw % thw) != 0
    if not padded:
        accumulate(False)          # every block is full; no mask ever needed
    elif grid_k == 1:
        accumulate(True)           # single (padded) block
    else:
        @pl.when(k == last)
        def _():
            accumulate(True)       # only the last block carries padding

        @pl.when(k != last)
        def _():
            accumulate(False)

    @pl.when(k == last)
    def _():
        # One cross-lane reduce + relayout per batch tile (epilogue only).
        pooled = jnp.sum(acc_ref[...], axis=-1) * inv_hw              # (TB, C) f32
        logits = jnp.dot(pooled.astype(w_ref.dtype), w_ref[...],      # MXU, native weight dtype
                         preferred_element_type=jnp.float32)          # (TB, N)
        o_ref[...] = (logits + b_ref[...].astype(jnp.float32)).astype(o_ref.dtype)


def _vmem_capacity_bytes():
    try:
        return int(pltpu.get_tpu_info().vmem_capacity_bytes)
    except Exception:
        return 64 * 1024 * 1024  # conservative default (v7x per-TC VMEM)


def _choose_tiles(B, C, HW, x_itemsize, w_itemsize, N, vmem_cap):
    """Pick (tb, thw, vmem_limit_bytes).  thw is always a multiple of 128."""
    if vmem_cap >= (100 << 20):      # v5e / v6e: 128 MiB physical VMEM
        target_block = 16 << 20
        base_limit = 96 << 20
    else:                            # v7x: 64 MiB per TensorCore
        target_block = 5 << 20
        base_limit = 38 << 20

    hw_pad = _round_up(HW, _LANE)

    # Batch tile: full batch if small, else a multiple of 8 (keeps the (tb, N)
    # output block's sublane dim aligned).  Grown only after thw is maxed out.
    tb = B if B <= 8 else 8

    # Spatial tile: largest multiple of 128 that keeps one x block near the
    # target (long contiguous DMA rows), capped so the unrolled accumulate loop
    # stays small.
    max_thw = max(_LANE,
                  (target_block // max(1, tb * C * x_itemsize)) // _LANE * _LANE)
    thw = min(hw_pad, max_thw, _MAX_CHUNKS * _LANE)

    # Grow tb past 8 only once the whole (padded) spatial extent fits a block.
    if thw == hw_pad and B > 8:
        tb_cap = B
        if B >= 16:
            # Keep >= 2 steps on the "parallel" batch axis so both v7x
            # TensorCores get work.
            tb_cap = min(B, _round_up(pl.cdiv(B, 2), 8))
        while (tb + 8 <= tb_cap
               and (tb + 8) * C * hw_pad * x_itemsize <= target_block):
            tb += 8

    # VMEM budget: double-buffered x block + weight/bias (2 buffers, worst
    # case) + lane-shaped f32 accumulator + double-buffered output block.
    n_pad = _round_up(N, _LANE)
    block_bytes = tb * C * thw * x_itemsize
    usage = (2 * block_bytes
             + 2 * C * n_pad * w_itemsize + 2 * n_pad * 4
             + tb * C * _LANE * 4
             + 2 * _round_up(tb, 8) * n_pad * 4)
    # Fallback for huge C (thw already clamped to 128): raise the limit rather
    # than silently exceeding it; always keep >= 4 MiB of physical headroom.
    vmem_limit = min(max(base_limit, usage + (4 << 20)), vmem_cap - (4 << 20))
    return tb, thw, int(vmem_limit)


def global_avg_pool_classifier(x, weight, bias):
    """x: (B, C, H, W); weight: (num_classes, C); bias: (num_classes,)."""
    B, C, H, W = x.shape
    N = weight.shape[0]
    HW = H * W

    x_flat = x.reshape(B, C, HW)  # free reshape of the NCHW producer layout
    w_t = weight.T                # (C, N) so the kernel dot is (TB,C) x (C,N)
    b2d = bias.reshape(1, N)

    vmem_cap = _vmem_capacity_bytes()
    tb, thw, vmem_limit = _choose_tiles(
        B, C, HW, x_flat.dtype.itemsize, w_t.dtype.itemsize, N, vmem_cap)
    grid = (pl.cdiv(B, tb), pl.cdiv(HW, thw))

    kernel = functools.partial(_gap_classifier_kernel,
                               hw=HW, thw=thw,
                               inv_hw=float(1.0 / HW),
                               grid_k=grid[1])

    cost = pl.CostEstimate(
        flops=B * C * HW + 2 * B * C * N + B * N,
        transcendentals=0,
        bytes_accessed=(B * C * HW * x_flat.dtype.itemsize
                        + C * N * w_t.dtype.itemsize
                        + N * bias.dtype.itemsize
                        + B * N * 4),
    )

    return pl.pallas_call(
        kernel,
        out_shape=jax.ShapeDtypeStruct((B, N), jnp.float32),
        grid_spec=pltpu.PrefetchScalarGridSpec(
            num_scalar_prefetch=0,
            grid=grid,
            in_specs=[
                pl.BlockSpec((tb, C, thw), lambda i, k: (i, 0, k)),
                pl.BlockSpec((C, N), lambda i, k: (0, 0)),  # VMEM-resident weight
                pl.BlockSpec((1, N), lambda i, k: (0, 0)),  # VMEM-resident bias
            ],
            out_specs=pl.BlockSpec((tb, N), lambda i, k: (i, 0)),
            scratch_shapes=[pltpu.VMEM((tb, C, _LANE), jnp.float32)],
        ),
        compiler_params=pltpu.CompilerParams(
            dimension_semantics=("parallel", "arbitrary"),
            vmem_limit_bytes=vmem_limit,
        ),
        cost_estimate=cost,
    )(x_flat, w_t, b2d)


def _reference(x, weight, bias):
    pooled = jnp.mean(x, axis=(2, 3))
    return pooled @ weight.T + bias


if __name__ == "__main__":
    key = jax.random.PRNGKey(0)
    kx, kw, kb = jax.random.split(key, 3)

    B, C, H, W = 2, 4, 16, 16
    num_classes = 8

    x = jax.random.normal(kx, (B, C, H, W), dtype=jnp.float32)
    # Deterministic parameter init (mimics nn.Linear uniform(-1/sqrt(C), 1/sqrt(C))).
    bound = 1.0 / (C ** 0.5)
    weight = jax.random.uniform(kw, (num_classes, C), minval=-bound, maxval=bound,
                                dtype=jnp.float32)
    bias = jax.random.uniform(kb, (num_classes,), minval=-bound, maxval=bound,
                              dtype=jnp.float32)

    logits = global_avg_pool_classifier(x, weight, bias)
    logits = jax.block_until_ready(logits)

    ref = _reference(x, weight, bias)
    assert logits.shape == (B, num_classes)
    assert jnp.allclose(logits, ref, atol=1e-5, rtol=1e-5)

    print("KERNEL_OK")
</pallas_src>

<mosaic_0001>
module attributes {stable_mosaic.version = 11 : i64} {
  func.func @_gap_classifier_kernel(%arg0: i32, %arg1: i32, %arg2: memref<2x4x256xf32, #tpu.memory_space<vmem>>, %arg3: memref<4x8xf32, #tpu.memory_space<vmem>>, %arg4: memref<1x8xf32, #tpu.memory_space<vmem>>, %arg5: memref<2x8xf32, #tpu.memory_space<vmem>>, %arg6: memref<2x4x128xf32, #tpu.memory_space<vmem>>) attributes {dimension_semantics = [#tpu.dimension_semantics<parallel>, #tpu.dimension_semantics<arbitrary>], iteration_bounds = array<i64: 1, 1>, scalar_prefetch = 0 : i64, scratch_operands = 1 : i64, tpu.core_type = #tpu.core_type<tc>, window_params = [{transform_indices = @transform_0, window_bounds = array<i64: 2, 4, 256>}, {pipeline_mode = #tpu.pipeline_mode<synchronous>, transform_indices = @transform_1, window_bounds = array<i64: 4, 8>}, {pipeline_mode = #tpu.pipeline_mode<synchronous>, transform_indices = @transform_2, window_bounds = array<i64: 1, 8>}, {transform_indices = @transform_3, window_bounds = array<i64: 2, 8>}]} {
    %c0_i32 = arith.constant 0 : i32
    %0 = arith.cmpi eq, %arg1, %c0_i32 : i32
    %1 = arith.extui %0 : i1 to i32
    %c0_i32_0 = arith.constant 0 : i32
    %2 = arith.cmpi ne, %1, %c0_i32_0 : i32
    scf.if %2 {
      %cst = arith.constant 0.000000e+00 : f32
      %14 = vector.broadcast %cst : f32 to vector<2x4x128xf32>
      %c0_19 = arith.constant 0 : index
      %c0_20 = arith.constant 0 : index
      %c0_21 = arith.constant 0 : index
      %15 = vector.load %arg6[%c0_19, %c0_20, %c0_21] : memref<2x4x128xf32, #tpu.memory_space<vmem>>, vector<2x4x128xf32>
      tpu.vector_store %arg6[%c0_19, %c0_20, %c0_21], %14 {strides = array<i32>} : memref<2x4x128xf32, #tpu.memory_space<vmem>>, vector<2x4x128xf32>,
    } else {
    }
    %c0 = arith.constant 0 : index
    %c0_1 = arith.constant 0 : index
    %c0_2 = arith.constant 0 : index
    %3 = vector.load %arg2[%c0, %c0_1, %c0_2] : memref<2x4x256xf32, #tpu.memory_space<vmem>>, vector<2x4x128xf32>
    %c0_3 = arith.constant 0 : index
    %c0_4 = arith.constant 0 : index
    %c0_5 = arith.constant 0 : index
    %4 = vector.load %arg6[%c0_3, %c0_4, %c0_5] : memref<2x4x128xf32, #tpu.memory_space<vmem>>, vector<2x4x128xf32>
    %5 = arith.addf %4, %3 : vector<2x4x128xf32>
    %c0_6 = arith.constant 0 : index
    %c0_7 = arith.constant 0 : index
    %c0_8 = arith.constant 0 : index
    %6 = vector.load %arg6[%c0_6, %c0_7, %c0_8] : memref<2x4x128xf32, #tpu.memory_space<vmem>>, vector<2x4x128xf32>
    tpu.vector_store %arg6[%c0_6, %c0_7, %c0_8], %5 {strides = array<i32>} : memref<2x4x128xf32, #tpu.memory_space<vmem>>, vector<2x4x128xf32>,
    %c0_9 = arith.constant 0 : index
    %c0_10 = arith.constant 0 : index
    %c128 = arith.constant 128 : index
    %7 = vector.load %arg2[%c0_9, %c0_10, %c128] : memref<2x4x256xf32, #tpu.memory_space<vmem>>, vector<2x4x128xf32>
    %c0_11 = arith.constant 0 : index
    %c0_12 = arith.constant 0 : index
    %c0_13 = arith.constant 0 : index
    %8 = vector.load %arg6[%c0_11, %c0_12, %c0_13] : memref<2x4x128xf32, #tpu.memory_space<vmem>>, vector<2x4x128xf32>
    %9 = arith.addf %8, %7 : vector<2x4x128xf32>
    %c0_14 = arith.constant 0 : index
    %c0_15 = arith.constant 0 : index
    %c0_16 = arith.constant 0 : index
    %10 = vector.load %arg6[%c0_14, %c0_15, %c0_16] : memref<2x4x128xf32, #tpu.memory_space<vmem>>, vector<2x4x128xf32>
    tpu.vector_store %arg6[%c0_14, %c0_15, %c0_16], %9 {strides = array<i32>} : memref<2x4x128xf32, #tpu.memory_space<vmem>>, vector<2x4x128xf32>,
    %c0_i32_17 = arith.constant 0 : i32
    %11 = arith.cmpi eq, %arg1, %c0_i32_17 : i32
    %12 = arith.extui %11 : i1 to i32
    %c0_i32_18 = arith.constant 0 : i32
    %13 = arith.cmpi ne, %12, %c0_i32_18 : i32
    scf.if %13 {
      %c0_19 = arith.constant 0 : index
      %c0_20 = arith.constant 0 : index
      %c0_21 = arith.constant 0 : index
      %14 = vector.load %arg6[%c0_19, %c0_20, %c0_21] : memref<2x4x128xf32, #tpu.memory_space<vmem>>, vector<2x4x128xf32>
      %cst = arith.constant dense<0.000000e+00> : vector<2x4xf32>
      %15 = vector.multi_reduction <add>, %14, %cst [2] : vector<2x4x128xf32> to vector<2x4xf32>
      %cst_22 = arith.constant 3.906250e-03 : f32
      %16 = vector.broadcast %cst_22 : f32 to vector<2x4xf32>
      %17 = arith.mulf %15, %16 : vector<2x4xf32>
      %c0_23 = arith.constant 0 : index
      %c0_24 = arith.constant 0 : index
      %18 = vector.load %arg3[%c0_23, %c0_24] : memref<4x8xf32, #tpu.memory_space<vmem>>, vector<4x8xf32>
      %cst_25 = arith.constant dense<0.000000e+00> : vector<2x8xf32>
      %19 = tpu.matmul %17, %18, %cst_25 {dimension_numbers = #tpu.dot_dimension_numbers<[1], [0], [0], [1], [0, 0, 1, 1], [], []>} : vector<2x4xf32>, vector<4x8xf32>, vector<2x8xf32> -> vector<2x8xf32>
      %c0_26 = arith.constant 0 : index
      %c0_27 = arith.constant 0 : index
      %20 = vector.load %arg4[%c0_26, %c0_27] : memref<1x8xf32, #tpu.memory_space<vmem>>, vector<1x8xf32>
      %21 = vector.broadcast %20 : vector<1x8xf32> to vector<2x8xf32>
      %22 = arith.addf %19, %21 : vector<2x8xf32>
      %c0_28 = arith.constant 0 : index
      %c0_29 = arith.constant 0 : index
      %23 = vector.load %arg5[%c0_28, %c0_29] : memref<2x8xf32, #tpu.memory_space<vmem>>, vector<2x8xf32>
      tpu.vector_store %arg5[%c0_28, %c0_29], %22 {strides = array<i32>} : memref<2x8xf32, #tpu.memory_space<vmem>>, vector<2x8xf32>,
    } else {
    }
    return
  }
  func.func @transform_0(%arg0: i32, %arg1: i32) -> (i32, i32, i32) {
    %c0_i32 = arith.constant 0 : i32
    %c0_i32_0 = arith.constant 0 : i32
    return %arg0, %c0_i32, %arg1 : i32, i32, i32
  }
  func.func @transform_1(%arg0: i32, %arg1: i32) -> (i32, i32) {
    %c0_i32 = arith.constant 0 : i32
    %c0_i32_0 = arith.constant 0 : i32
    %c0_i32_1 = arith.constant 0 : i32
    return %c0_i32, %c0_i32_0 : i32, i32
  }
  func.func @transform_2(%arg0: i32, %arg1: i32) -> (i32, i32) {
    %c0_i32 = arith.constant 0 : i32
    %c0_i32_0 = arith.constant 0 : i32
    %c0_i32_1 = arith.constant 0 : i32
    return %c0_i32, %c0_i32_0 : i32, i32
  }
  func.func @transform_3(%arg0: i32, %arg1: i32) -> (i32, i32) {
    %c0_i32 = arith.constant 0 : i32
    %c0_i32_0 = arith.constant 0 : i32
    return %arg0, %c0_i32 : i32, i32
  }
}

</mosaic_0001>

<llo_original>
// kernel: tpu_custom_call.1
$region0: #{tpu_custom_call.1}
  #allocation0 [shape = 'u32[]', space=smem, size = 0x4, offset = 0x4, fixed_abs, tag = 'smem constant byte address 0x4 - core index']
  #allocation1 [shape = 'u32[144,128]{1,0:T(1,128)}', space=vmem, size = 0x12000, scoped, tag = 'internal scratch']
  #allocation2 [shape = 'f32[2,4,128]{2,1,0:T(4,128)}', space=vmem, size = 0x1000, scoped, tag = 'scratch operand']
  %s0 = inlined_call_operand.hbm [shape: f32[2,4,256], index: 0, kind: input, shape index: {}]
  %s1 = inlined_call_operand.hbm [shape: f32[4,8], index: 1, kind: input, shape index: {}]
  %s2 = inlined_call_operand.vmem [shape: f32[1,8], index: 2, kind: input, shape index: {}]
  %s3 = inlined_call_operand.hbm [shape: f32[2,8], index: 3, kind: output, shape index: {}]
  %s4 = sld [smem:[#allocation0]]
  $region38: #{tpu_custom_call.1} parent=0
    _
  %s6 = ssub.s32 1, %s4
  %s7 = scalar_select 0, %s6, %s4
  $region1: #{tpu_custom_call.1} parent=0
    #allocation3 [shape = 'u8[8192]{0}', space=vmem, size = 0x2000, scoped, tag = 'input window, operand 0, single buffered']
    #allocation4 [shape = 's32[1]{0}', space=sflag, size = 0x4, scoped, tag = 'scoped memory for tpu_custom_call.1']
    #allocation5 [shape = 's32[1]{0}', space=sflag, size = 0x4, scoped, tag = 'scoped memory for tpu_custom_call.1']
    #allocation6 [shape = 'u8[2048]{0}', space=vmem, size = 0x800, scoped, tag = 'input window, operand 1, single buffered']
    #allocation7 [shape = 's32[1]{0}', space=sflag, size = 0x4, scoped, tag = 'scoped memory for tpu_custom_call.1']
    #allocation8 [shape = 'u8[1024]{0}', space=vmem, size = 0x400, scoped, tag = 'output window, operand 0, single buffered']
    %8 = vsyncpa [#allocation4], 0
    %9 = vsyncpa [#allocation7], 0
    %10 = vsyncpa [#allocation5], 0
    // Predicated region
    $region2: #{tpu_custom_call.1} parent=1 // pred_check
      _
    $region3: #{tpu_custom_call.1} parent=1 // pred_check_branch
      %12 = sbr.rel (0) target = $region5
    $region4: #{tpu_custom_call.1} parent=1 // pred_region
      %s14 = ssub.s32 256, 256
      %15 = vsyncadd [#allocation4], %s14
      %s16 = sshll.u32 [#allocation3], 4
      %s17 = int_to_ptr.vmem [resolvable:$true] %s16
      %22 = dma.hbm_to_vmem [thread:$0]  %s0, 256, %s17, [#allocation4], 128, 128, 8
    $region5: #{tpu_custom_call.1} parent=1 // pred_fallthru
      _
    // Predicated region
    $region6: #{tpu_custom_call.1} parent=1 // pred_check
      _
    $region7: #{tpu_custom_call.1} parent=1 // pred_check_branch
      %24 = sbr.rel (0) target = $region9
    $region8: #{tpu_custom_call.1} parent=1 // pred_region
      %s26 = ssub.s32 64, 64
      %27 = vsyncadd [#allocation7], %s26
      %s29 = sshll.u32 [#allocation6], 4
      %s30 = int_to_ptr.vmem [resolvable:$true] %s29
      %32 = dma.hbm_to_vmem [thread:$0]  %s1, 64, %s30, [#allocation7]
    $region9: #{tpu_custom_call.1} parent=1 // pred_fallthru
      _
    // Predicated region
    $region10: #{tpu_custom_call.1} parent=1 // pred_check
      _
    $region11: #{tpu_custom_call.1} parent=1 // pred_check_branch
      %34 = sbr.rel (0) target = $region13
    $region12: #{tpu_custom_call.1} parent=1 // pred_region
      _
    $region13: #{tpu_custom_call.1} parent=1 // pred_fallthru
      _
    // Predicated region
    $region14: #{tpu_custom_call.1} parent=1 // pred_check
      _
    $region15: #{tpu_custom_call.1} parent=1 // pred_check_branch
      %36 = sbr.rel (0) target = $region17
    $region16: #{tpu_custom_call.1} parent=1 // pred_region
      %37 = dma.done [#allocation4], 256
    $region17: #{tpu_custom_call.1} parent=1 // pred_fallthru
      _
    // Predicated region
    $region18: #{tpu_custom_call.1} parent=1 // pred_check
      _
    $region19: #{tpu_custom_call.1} parent=1 // pred_check_branch
      %39 = sbr.rel (0) target = $region21
    $region20: #{tpu_custom_call.1} parent=1 // pred_region
      %40 = dma.done [#allocation7], 64
    $region21: #{tpu_custom_call.1} parent=1 // pred_fallthru
      _
    %p41 = scmp.eq.s32.totalorder 0, 0
    // Predicated region
    $region22: #{tpu_custom_call.1} parent=1 // pred_check
      %p42 = pneg %p41
    $region23: #{tpu_custom_call.1} parent=1 // pred_check_branch
      %44 = sbr.rel (%p42) target = $region25
    $region24: #{tpu_custom_call.1} parent=1 // pred_region
      %45 = vst [vmem:[#allocation2] sm:$0xf] 0.0
      %46 = vst [vmem:[#allocation2 + $0x4] sm:$0xf] 0.0
    $region25: #{tpu_custom_call.1} parent=1 // pred_fallthru
      _
    %v47 = vld [vmem:[#allocation3] sm:$0xf]
    %v48 = vld [vmem:[#allocation3 + $0x8] sm:$0xf]
    %v49 = vld [vmem:[#allocation2] sm:$0xf]
    %v50 = vld [vmem:[#allocation2 + $0x4] sm:$0xf]
    %v51 = vadd.f32 %v49, %v47
    %v52 = vadd.f32 %v50, %v48
    %53 = vst [vmem:[#allocation2] sm:$0xf] %v51
    %54 = vst [vmem:[#allocation2 + $0x4] sm:$0xf] %v52
    %v55 = vld [vmem:[#allocation3 + $0x4] sm:$0xf]
    %v56 = vld [vmem:[#allocation3 + $0xc] sm:$0xf]
    %v57 = vld [vmem:[#allocation2] sm:$0xf]
    %v58 = vld [vmem:[#allocation2 + $0x4] sm:$0xf]
    %v59 = vadd.f32 %v57, %v55
    %v60 = vadd.f32 %v58, %v56
    %61 = vst [vmem:[#allocation2] sm:$0xf] %v59
    %62 = vst [vmem:[#allocation2 + $0x4] sm:$0xf] %v60
    // Predicated region
    $region26: #{tpu_custom_call.1} parent=1 // pred_check
      %p63 = pneg %p41
    $region27: #{tpu_custom_call.1} parent=1 // pred_check_branch
      %65 = sbr.rel (%p63) target = $region29
    $region28: #{tpu_custom_call.1} parent=1 // pred_region
      %v66 = vld [vmem:[#allocation2] sm:$0xf]
      %v67 = vld [vmem:[#allocation2 + $0x4] sm:$0xf]
      %vm68 = vcmask 1043456
      %v69 = vsel %vm68, %v66, 0.0
      %70 = vadd.xlane.f32.xlu0 %v69
      %v71 = vpop.xlane.xlu0 %70
      %v72 = vsel %vm68, %v67, 0.0
      %73 = vadd.xlane.f32.xlu0 %v72
      %v74 = vpop.xlane.xlu0 %73
      %v75 = vmul.f32 %v71, 0.00390625
      %v76 = vmul.f32 %v74, 0.00390625
      %v77 = vld [vmem:[#allocation6] sm:$0xf]
      %v78 = vld [vmem:[%s2] sm:$0x1]
      %v80 = vlaneseq
      %v81 = vshrl.u32 %v80, 7
      %v82 = vsub.s32 0, %v81
      %v83 = vrot.slane %v78, %v82
      %v87 = vlaneseq
      %v88 = vand.u32 %v87, 127
      %v89 = vlaneseq
      %v90 = vshrl.u32 %v89, 7
      %v91 = vsub.s32 %v88, %v90
      %v92 = vrot.slane %v75, %v91
      %v93 = vlaneseq
      %v94 = vshrl.u32 %v93, 7
      %v95 = vsub.s32 %v88, %v94
      %v96 = vrot.slane %v76, %v95
      %vm97 = vcmask 1041409
      %v98 = vsel %vm97, %v96, %v92
      %vm99 = vcmask 31744
      %v100 = vsel %vm99, %v98, 0
      %v103 = vsel %vm68, %v77, 0
      %105 = vmatprep.subr.mxu0 0.0
      %106 = vmatpush1.msra.mxu0 %v103
      %107 = vmatprep.subr.mxu0 0.0
      %108 = vmatpush1.msra.mxu0 0.0
      %109 = vmatprep.subr.mxu0 0.0
      %110 = vmatpush1.msra.mxu0 0.0
      %111 = vmatprep.subr.mxu0 0.0
      %112 = vmatpush1.msra.mxu0 0.0
      %113 = vmatprep.subr.mxu0 0.0
      %114 = vmatpush1.msra.mxu0 0.0
      %115 = vmatprep.subr.mxu0 0.0
      %116 = vmatpush1.msra.mxu0 0.0
      %117 = vmatprep.subr.mxu0 0.0
      %118 = vmatpush1.msra.mxu0 0.0
      %119 = vmatprep.subr.mxu0 0.0
      %120 = vmatpush1.msra.mxu0 0.0
      %121 = vmatprep.subr.mxu0 0.0
      %122 = vmatpush1.msra.mxu0 0.0
      %123 = vmatprep.subr.mxu0 0.0
      %124 = vmatpush1.msra.mxu0 0.0
      %125 = vmatprep.subr.mxu0 0.0
      %126 = vmatpush1.msra.mxu0 0.0
      %127 = vmatprep.subr.mxu0 0.0
      %128 = vmatpush1.msra.mxu0 0.0
      %129 = vmatprep.subr.mxu0 0.0
      %130 = vmatpush1.msra.mxu0 0.0
      %131 = vmatprep.subr.mxu0 0.0
      %132 = vmatpush1.msra.mxu0 0.0
      %133 = vmatprep.subr.mxu0 0.0
      %134 = vmatpush1.msra.mxu0 0.0
      %135 = vmatprep.subr.mxu0 0.0
      %136 = vmatpush1.msra.mxu0 0.0
      %137 = vmatprep.subr.mxu0 0.0
      %138 = vmatpush1.msra.mxu0 0.0
      %139 = vmatprep.subr.mxu0 0.0
      %140 = vmatpush1.msra.mxu0 0.0
      %141 = vmatprep.subr.mxu0 0.0
      %142 = vmatpush1.msra.mxu0 0.0
      %143 = vmatprep.subr.mxu0 0.0
      %144 = vmatpush1.msra.mxu0 0.0
      %145 = vmatprep.subr.mxu0 0.0
      %146 = vmatpush1.msra.mxu0 0.0
      %147 = vmatprep.subr.mxu0 0.0
      %148 = vmatpush1.msra.mxu0 0.0
      %149 = vmatprep.subr.mxu0 0.0
      %150 = vmatpush1.msra.mxu0 0.0
      %151 = vmatprep.subr.mxu0 0.0
      %152 = vmatpush1.msra.mxu0 0.0
      %153 = vmatprep.subr.mxu0 0.0
      %154 = vmatpush1.msra.mxu0 0.0
      %155 = vmatprep.subr.mxu0 0.0
      %156 = vmatpush1.msra.mxu0 0.0
      %157 = vmatprep.subr.mxu0 0.0
      %158 = vmatpush1.msra.mxu0 0.0
      %159 = vmatprep.subr.mxu0 0.0
      %160 = vmatpush1.msra.mxu0 0.0
      %161 = vmatprep.subr.mxu0 0.0
      %162 = vmatpush1.msra.mxu0 0.0
      %163 = vmatprep.subr.mxu0 0.0
      %164 = vmatpush1.msra.mxu0 0.0
      %165 = vmatprep.subr.mxu0 0.0
      %166 = vmatpush1.msra.mxu0 0.0
      %167 = vmatprep.subr.mxu0 0.0
      %168 = vmatpush1.msra.mxu0 0.0
      %169 = vmatprep.mubr.f32.mxu0 0.0
      %170 = vmatmul.mubr.f32.gmra.mrb[0].mxu0 %v100
      %v171 = vpop.f32.mrb[0].mxu0
      %v172 = vadd.f32 %v83, %v171
      %v173 = vpop.f32.mrb[0].mxu0
      %174 = vdwg.mxu0
      %vm175 = vcmask 58368
      %176 = vst.msk [vmem:[#allocation8] sm:$0x3] %vm175, %v172
    $region29: #{tpu_custom_call.1} parent=1 // pred_fallthru
      _
    // Predicated region
    $region30: #{tpu_custom_call.1} parent=1 // pred_check
      _
    $region31: #{tpu_custom_call.1} parent=1 // pred_check_branch
      %178 = sbr.rel (0) target = $region33
    $region32: #{tpu_custom_call.1} parent=1 // pred_region
      %s180 = ssub.s32 32, 32
      %181 = vsyncadd [#allocation5], %s180
      %s183 = sshll.u32 [#allocation8], 4
      %s184 = int_to_ptr.vmem [resolvable:$true] %s183
      %186 = dma.vmem_to_hbm [thread:$0]  %s184, 32, %s3, [#allocation5]
    $region33: #{tpu_custom_call.1} parent=1 // pred_fallthru
      _
    // Predicated region
    $region34: #{tpu_custom_call.1} parent=1 // pred_check
      _
    $region35: #{tpu_custom_call.1} parent=1 // pred_check_branch
      %188 = sbr.rel (0) target = $region37
    $region36: #{tpu_custom_call.1} parent=1 // pred_region
      %189 = dma.done [#allocation5], 32
    $region37: #{tpu_custom_call.1} parent=1 // pred_fallthru
      _
    %190 = vsyncpa [#allocation4], 1
    %191 = vsyncpa [#allocation7], 1
    %192 = vsyncpa [#allocation5], 1

</llo_original>
